<compile_context>
chip_gen: v5e
topology: v5e:2x2
jax: 0.10.0
libtpu: 0.0.40
codegen_flags: <defaults>
</compile_context>

<pallas_src>
import functools

import jax
import jax.numpy as jnp
from jax import lax
from jax.experimental import pallas as pl
from jax.experimental.pallas import tpu as pltpu

LANES = 128
TARGET_BLOCK_BYTES = 2 * 1024 * 1024   # per-input per-block VMEM footprint
NUM_SPLITS = 1                         # leading grid axis (see TODO above for v7x)
UNROLL = 8


def _round_up(x, m):
    return (x + m - 1) // m * m


def _min_sublane(dtype):
    # Minimum second-to-last tile dim for a dtype: f32 -> 8, bf16 -> 16, int8/fp8 -> 32.
    return max(8, 32 // jnp.dtype(dtype).itemsize)


def _dice_bce_kernel(x_ref, t_ref, out_ref, *, n_total, block_rows, n_inner, sub_rows):
    c = pl.program_id(0)
    i = pl.program_id(1)

    @pl.when(i == 0)
    def _():
        out_ref[...] = jnp.zeros_like(out_ref)

    n_sub = block_rows // sub_rows
    unroll = max(1, min(UNROLL, n_sub))
    block_elems = block_rows * LANES
    gidx = c * n_inner + i
    block_start = gidx * block_elems        # int32; wrapper asserts no overflow

    def tile_stats(xs, ts):
        # Per-element math for one (sub_rows, LANES) sub-tile; stays in vregs.
        x = xs.astype(jnp.float32)
        t = ts.astype(jnp.float32)
        e = jnp.exp(-jnp.abs(x))
        denom = 1.0 + e
        p = jnp.where(x >= 0, 1.0, e) / denom          # sigmoid(x), numerically stable
        log_denom = jnp.log(denom)                     # = log(1 + exp(-|x|))
        # BCE(sigmoid(x), t) = softplus(x) - x*t = log_denom + max(x, 0) - x*t.
        # torch's per-term clamp of log(p)/log(1-p) at -100 == clipping x to +/-100
        # (difference <= exp(-100)).
        x_c = jnp.clip(x, -100.0, 100.0)
        bce = log_denom + jnp.maximum(x_c, 0.0) - x_c * t
        return p * t, p, t, bce

    def run_block(masked):
        def body(j, carry):
            a_pt, a_p, a_t, a_b = carry
            r0 = pl.multiple_of(j * sub_rows, sub_rows)
            pt, p, t, b = tile_stats(x_ref[pl.ds(r0, sub_rows), :],
                                     t_ref[pl.ds(r0, sub_rows), :])
            if masked:
                # Tail tile: elements at/after n_total are wrapper padding or garbage
                # rows read past the array edge; jnp.where keeps NaN/Inf from leaking.
                row = lax.broadcasted_iota(jnp.int32, (sub_rows, LANES), 0)
                col = lax.broadcasted_iota(jnp.int32, (sub_rows, LANES), 1)
                valid = n_total - (block_start + r0 * LANES)
                keep = row * LANES + col < valid
                pt = jnp.where(keep, pt, 0.0)
                p = jnp.where(keep, p, 0.0)
                t = jnp.where(keep, t, 0.0)
                b = jnp.where(keep, b, 0.0)
            return a_pt + pt, a_p + p, a_t + t, a_b + b

        init = tuple(jnp.zeros((sub_rows, LANES), jnp.float32) for _ in range(4))
        accs = lax.fori_loop(0, n_sub, body, init, unroll=unroll)

        def fold(a):   # (sub_rows, 128) -> (8, 128); no-op for f32 sub-tiles
            return a if sub_rows == 8 else jnp.sum(
                a.reshape(sub_rows // 8, 8, LANES), axis=0)

        out_ref[0] += fold(accs[0])   # sum(p * t)
        out_ref[1] += fold(accs[1])   # sum(p)
        out_ref[2] += fold(accs[2])   # sum(t)
        out_ref[3] += fold(accs[3])   # sum(bce)

    # First block index whose element range is not fully inside [0, n_total).
    first_tail = n_total // block_elems

    @pl.when(gidx < first_tail)
    def _():
        run_block(masked=False)       # interior block: zero mask work

    @pl.when(gidx >= first_tail)
    def _():
        run_block(masked=True)        # ragged / padded block


def dice_bce_loss(inputs, targets, smooth=1.0):
    """Pallas TPU implementation of DiceBCELoss.forward (returns scalar f32)."""
    n_total = int(inputs.size)
    x = inputs.reshape(-1)    # keep native dtype; cast to f32 happens in-kernel
    t = targets.reshape(-1)

    sub_rows = max(_min_sublane(x.dtype), _min_sublane(t.dtype))
    itemsize = max(jnp.dtype(x.dtype).itemsize, jnp.dtype(t.dtype).itemsize)

    rows_data = -(-n_total // LANES)
    rows_padded = _round_up(max(rows_data, sub_rows), sub_rows)
    pad = rows_padded * LANES - n_total
    # Pad at most one (sub_rows x 128) tile (usually 0 -> no copy at all).
    if pad:
        x = jnp.pad(x, (0, pad))
        t = jnp.pad(t, (0, pad))
    x2 = x.reshape(rows_padded, LANES)
    t2 = t.reshape(rows_padded, LANES)

    max_block_rows = _round_up(
        max(TARGET_BLOCK_BYTES // (LANES * itemsize), sub_rows), sub_rows)
    block_rows = min(max_block_rows, rows_padded)
    n_inner = -(-rows_padded // (NUM_SPLITS * block_rows))
    n_blocks_data = -(-rows_padded // block_rows)

    # int32 flat-index math inside the kernel.
    assert n_total + NUM_SPLITS * n_inner * block_rows * LANES < 2**31, (
        "DiceBCELoss pallas kernel: input too large for int32 index math")

    kernel = functools.partial(
        _dice_bce_kernel, n_total=n_total, block_rows=int(block_rows),
        n_inner=int(n_inner), sub_rows=int(sub_rows))

    last_blk = n_blocks_data - 1   # clamp so over-covering grid steps never DMA fully OOB
    data_spec = pl.BlockSpec(
        (block_rows, LANES),
        lambda c, i: (jnp.minimum(c * n_inner + i, last_blk), 0))

    partials = pl.pallas_call(
        kernel,
        out_shape=jax.ShapeDtypeStruct((NUM_SPLITS * 4, 8, LANES), jnp.float32),
        grid_spec=pltpu.PrefetchScalarGridSpec(
            num_scalar_prefetch=0,
            grid=(NUM_SPLITS, n_inner),
            in_specs=[data_spec, data_spec],
            out_specs=pl.BlockSpec((4, 8, LANES), lambda c, i: (c, 0, 0)),
        ),
        compiler_params=pltpu.CompilerParams(
            dimension_semantics=("parallel", "arbitrary"),
        ),
    )(x2, t2)

    # Tiny XLA epilogue: combine per-split (4, 8, 128) partials into scalars.
    sums = partials.reshape(NUM_SPLITS, 4, -1).sum(axis=(0, 2))
    inter, p_sum, t_sum, bce_sum = sums[0], sums[1], sums[2], sums[3]
    dice_loss = 1.0 - (2.0 * inter + smooth) / (p_sum + t_sum + smooth)
    bce_mean = bce_sum / n_total
    return bce_mean + dice_loss


def _dice_bce_ref(inputs, targets, smooth=1.0):
    p = jax.nn.sigmoid(inputs.reshape(-1).astype(jnp.float32))
    t = targets.reshape(-1).astype(jnp.float32)
    inter = jnp.sum(p * t)
    union = jnp.sum(p) + jnp.sum(t)
    dice = 1.0 - (2.0 * inter + smooth) / (union + smooth)
    bce = jnp.mean(-(t * jnp.maximum(jnp.log(p), -100.0)
                     + (1.0 - t) * jnp.maximum(jnp.log(1.0 - p), -100.0)))
    return bce + dice


if __name__ == "__main__":
    key = jax.random.PRNGKey(0)
    k1, k2, k3, k4 = jax.random.split(key, 4)

    # NCHW logits and binary targets, as the PyTorch module expects.
    x = jax.random.normal(k1, (2, 4, 16, 16), dtype=jnp.float32)
    t = jax.random.bernoulli(k2, 0.5, (2, 4, 16, 16)).astype(jnp.float32)
    loss = jax.block_until_ready(dice_bce_loss(x, t, smooth=1.0))
    ref = jax.block_until_ready(_dice_bce_ref(x, t, smooth=1.0))
    assert jnp.allclose(loss, ref, rtol=1e-5, atol=1e-5), (loss, ref)

    # Ragged-size input to exercise the in-kernel tail mask (non-multiple of 128).
    x2 = jax.random.normal(k3, (3, 5, 7, 11), dtype=jnp.float32)
    t2 = jax.random.bernoulli(k4, 0.5, (3, 5, 7, 11)).astype(jnp.float32)
    loss2 = jax.block_until_ready(dice_bce_loss(x2, t2, smooth=1.0))
    ref2 = jax.block_until_ready(_dice_bce_ref(x2, t2, smooth=1.0))
    assert jnp.allclose(loss2, ref2, rtol=1e-5, atol=1e-5), (loss2, ref2)

    print("KERNEL_OK")
</pallas_src>

<mosaic_0001>
module attributes {stable_mosaic.version = 11 : i64} {
  func.func @_dice_bce_kernel(%arg0: i32, %arg1: i32, %arg2: memref<16x128xf32, #tpu.memory_space<vmem>>, %arg3: memref<16x128xf32, #tpu.memory_space<vmem>>, %arg4: memref<4x8x128xf32, #tpu.memory_space<vmem>>) attributes {dimension_semantics = [#tpu.dimension_semantics<parallel>, #tpu.dimension_semantics<arbitrary>], iteration_bounds = array<i64: 1, 1>, scalar_prefetch = 0 : i64, scratch_operands = 0 : i64, tpu.core_type = #tpu.core_type<tc>, window_params = [{transform_indices = @transform_0, window_bounds = array<i64: 16, 128>}, {transform_indices = @transform_1, window_bounds = array<i64: 16, 128>}, {transform_indices = @transform_2, window_bounds = array<i64: 4, 8, 128>}]} {
    %c0_i32 = arith.constant 0 : i32
    %0 = arith.cmpi eq, %arg1, %c0_i32 : i32
    %1 = arith.extui %0 : i1 to i32
    %c0_i32_0 = arith.constant 0 : i32
    %2 = arith.cmpi ne, %1, %c0_i32_0 : i32
    scf.if %2 {
      %cst = arith.constant 0.000000e+00 : f32
      %12 = vector.broadcast %cst : f32 to vector<4x8x128xf32>
      %c0 = arith.constant 0 : index
      %c0_5 = arith.constant 0 : index
      %c0_6 = arith.constant 0 : index
      %13 = vector.load %arg4[%c0, %c0_5, %c0_6] : memref<4x8x128xf32, #tpu.memory_space<vmem>>, vector<4x8x128xf32>
      tpu.vector_store %arg4[%c0, %c0_5, %c0_6], %12 {strides = array<i32>} : memref<4x8x128xf32, #tpu.memory_space<vmem>>, vector<4x8x128xf32>,
    } else {
    }
    %c1_i32 = arith.constant 1 : i32
    %3 = arith.muli %arg0, %c1_i32 : i32
    %4 = arith.addi %3, %arg1 : i32
    %c2048_i32 = arith.constant 2048 : i32
    %5 = arith.muli %4, %c2048_i32 : i32
    %c1_i32_1 = arith.constant 1 : i32
    %6 = arith.cmpi slt, %4, %c1_i32_1 : i32
    %7 = arith.extui %6 : i1 to i32
    %c0_i32_2 = arith.constant 0 : i32
    %8 = arith.cmpi ne, %7, %c0_i32_2 : i32
    scf.if %8 {
      %cst = arith.constant 0.000000e+00 : f32
      %12 = vector.broadcast %cst : f32 to vector<8x128xf32>
      %cst_5 = arith.constant 0.000000e+00 : f32
      %13 = vector.broadcast %cst_5 : f32 to vector<8x128xf32>
      %cst_6 = arith.constant 0.000000e+00 : f32
      %14 = vector.broadcast %cst_6 : f32 to vector<8x128xf32>
      %cst_7 = arith.constant 0.000000e+00 : f32
      %15 = vector.broadcast %cst_7 : f32 to vector<8x128xf32>
      %c0_i32_8 = arith.constant 0 : i32
      %c8_i32 = arith.constant 8 : i32
      %16 = arith.muli %c0_i32_8, %c8_i32 : i32
      %17 = tpu.assume_multiple %16, 8 : i32
      %18 = arith.index_cast %17 : i32 to index
      %c0 = arith.constant 0 : index
      %19 = vector.load %arg2[%18, %c0] : memref<16x128xf32, #tpu.memory_space<vmem>>, vector<8x128xf32>
      %20 = arith.index_cast %17 : i32 to index
      %c0_9 = arith.constant 0 : index
      %21 = vector.load %arg3[%20, %c0_9] : memref<16x128xf32, #tpu.memory_space<vmem>>, vector<8x128xf32>
      %22 = math.absf %19 : vector<8x128xf32>
      %cst_10 = arith.constant 0.000000e+00 : f32
      %23 = vector.broadcast %cst_10 : f32 to vector<8x128xf32>
      %24 = arith.subf %23, %22 : vector<8x128xf32>
      %25 = math.exp %24 : vector<8x128xf32>
      %cst_11 = arith.constant 1.000000e+00 : f32
      %26 = vector.broadcast %cst_11 : f32 to vector<8x128xf32>
      %27 = arith.addf %26, %25 : vector<8x128xf32>
      %cst_12 = arith.constant 0.000000e+00 : f32
      %28 = vector.broadcast %cst_12 : f32 to vector<8x128xf32>
      %29 = arith.cmpf oge, %19, %28 : vector<8x128xf32>
      %cst_13 = arith.constant 1.000000e+00 : f32
      %30 = vector.broadcast %cst_13 : f32 to vector<8x128xf32>
      %31 = arith.select %29, %30, %25 : vector<8x128xi1>, vector<8x128xf32>
      %32 = arith.divf %31, %27 : vector<8x128xf32>
      %33 = math.log %27 : vector<8x128xf32>
      %cst_14 = arith.constant -1.000000e+02 : f32
      %cst_15 = arith.constant 1.000000e+02 : f32
      %34 = vector.broadcast %cst_14 : f32 to vector<8x128xf32>
      %35 = arith.maximumf %34, %19 : vector<8x128xf32>
      %36 = vector.broadcast %cst_15 : f32 to vector<8x128xf32>
      %37 = arith.minimumf %36, %35 : vector<8x128xf32>
      %cst_16 = arith.constant 0.000000e+00 : f32
      %38 = vector.broadcast %cst_16 : f32 to vector<8x128xf32>
      %39 = arith.maximumf %37, %38 : vector<8x128xf32>
      %40 = arith.addf %33, %39 : vector<8x128xf32>
      %41 = arith.mulf %37, %21 : vector<8x128xf32>
      %42 = arith.subf %40, %41 : vector<8x128xf32>
      %43 = arith.mulf %32, %21 : vector<8x128xf32>
      %44 = arith.addf %12, %43 : vector<8x128xf32>
      %45 = arith.addf %13, %32 : vector<8x128xf32>
      %46 = arith.addf %14, %21 : vector<8x128xf32>
      %47 = arith.addf %15, %42 : vector<8x128xf32>
      %c1_i32_17 = arith.constant 1 : i32
      %c8_i32_18 = arith.constant 8 : i32
      %48 = arith.muli %c1_i32_17, %c8_i32_18 : i32
      %49 = tpu.assume_multiple %48, 8 : i32
      %50 = arith.index_cast %49 : i32 to index
      %c0_19 = arith.constant 0 : index
      %51 = vector.load %arg2[%50, %c0_19] : memref<16x128xf32, #tpu.memory_space<vmem>>, vector<8x128xf32>
      %52 = arith.index_cast %49 : i32 to index
      %c0_20 = arith.constant 0 : index
      %53 = vector.load %arg3[%52, %c0_20] : memref<16x128xf32, #tpu.memory_space<vmem>>, vector<8x128xf32>
      %54 = math.absf %51 : vector<8x128xf32>
      %cst_21 = arith.constant 0.000000e+00 : f32
      %55 = vector.broadcast %cst_21 : f32 to vector<8x128xf32>
      %56 = arith.subf %55, %54 : vector<8x128xf32>
      %57 = math.exp %56 : vector<8x128xf32>
      %cst_22 = arith.constant 1.000000e+00 : f32
      %58 = vector.broadcast %cst_22 : f32 to vector<8x128xf32>
      %59 = arith.addf %58, %57 : vector<8x128xf32>
      %cst_23 = arith.constant 0.000000e+00 : f32
      %60 = vector.broadcast %cst_23 : f32 to vector<8x128xf32>
      %61 = arith.cmpf oge, %51, %60 : vector<8x128xf32>
      %cst_24 = arith.constant 1.000000e+00 : f32
      %62 = vector.broadcast %cst_24 : f32 to vector<8x128xf32>
      %63 = arith.select %61, %62, %57 : vector<8x128xi1>, vector<8x128xf32>
      %64 = arith.divf %63, %59 : vector<8x128xf32>
      %65 = math.log %59 : vector<8x128xf32>
      %cst_25 = arith.constant -1.000000e+02 : f32
      %cst_26 = arith.constant 1.000000e+02 : f32
      %66 = vector.broadcast %cst_25 : f32 to vector<8x128xf32>
      %67 = arith.maximumf %66, %51 : vector<8x128xf32>
      %68 = vector.broadcast %cst_26 : f32 to vector<8x128xf32>
      %69 = arith.minimumf %68, %67 : vector<8x128xf32>
      %cst_27 = arith.constant 0.000000e+00 : f32
      %70 = vector.broadcast %cst_27 : f32 to vector<8x128xf32>
      %71 = arith.maximumf %69, %70 : vector<8x128xf32>
      %72 = arith.addf %65, %71 : vector<8x128xf32>
      %73 = arith.mulf %69, %53 : vector<8x128xf32>
      %74 = arith.subf %72, %73 : vector<8x128xf32>
      %75 = arith.mulf %64, %53 : vector<8x128xf32>
      %76 = arith.addf %44, %75 : vector<8x128xf32>
      %77 = arith.addf %45, %64 : vector<8x128xf32>
      %78 = arith.addf %46, %53 : vector<8x128xf32>
      %79 = arith.addf %47, %74 : vector<8x128xf32>
      %c2_i32 = arith.constant 2 : i32
      %c0_28 = arith.constant 0 : index
      %c0_29 = arith.constant 0 : index
      %c0_30 = arith.constant 0 : index
      %80 = vector.load %arg4[%c0_28, %c0_29, %c0_30] : memref<4x8x128xf32, #tpu.memory_space<vmem>>, vector<1x8x128xf32>
      %81 = vector.shape_cast %80 : vector<1x8x128xf32> to vector<8x128xf32>
      %82 = arith.addf %81, %76 : vector<8x128xf32>
      %c0_31 = arith.constant 0 : index
      %c0_32 = arith.constant 0 : index
      %c0_33 = arith.constant 0 : index
      %83 = vector.load %arg4[%c0_31, %c0_32, %c0_33] : memref<4x8x128xf32, #tpu.memory_space<vmem>>, vector<1x8x128xf32>
      %84 = vector.shape_cast %83 : vector<1x8x128xf32> to vector<8x128xf32>
      %85 = vector.shape_cast %82 : vector<8x128xf32> to vector<1x8x128xf32>
      tpu.vector_store %arg4[%c0_31, %c0_32, %c0_33], %85 {strides = array<i32>} : memref<4x8x128xf32, #tpu.memory_space<vmem>>, vector<1x8x128xf32>,
      %c1 = arith.constant 1 : index
      %c0_34 = arith.constant 0 : index
      %c0_35 = arith.constant 0 : index
      %86 = vector.load %arg4[%c1, %c0_34, %c0_35] : memref<4x8x128xf32, #tpu.memory_space<vmem>>, vector<1x8x128xf32>
      %87 = vector.shape_cast %86 : vector<1x8x128xf32> to vector<8x128xf32>
      %88 = arith.addf %87, %77 : vector<8x128xf32>
      %c1_36 = arith.constant 1 : index
      %c0_37 = arith.constant 0 : index
      %c0_38 = arith.constant 0 : index
      %89 = vector.load %arg4[%c1_36, %c0_37, %c0_38] : memref<4x8x128xf32, #tpu.memory_space<vmem>>, vector<1x8x128xf32>
      %90 = vector.shape_cast %89 : vector<1x8x128xf32> to vector<8x128xf32>
      %91 = vector.shape_cast %88 : vector<8x128xf32> to vector<1x8x128xf32>
      tpu.vector_store %arg4[%c1_36, %c0_37, %c0_38], %91 {strides = array<i32>} : memref<4x8x128xf32, #tpu.memory_space<vmem>>, vector<1x8x128xf32>,
      %c2 = arith.constant 2 : index
      %c0_39 = arith.constant 0 : index
      %c0_40 = arith.constant 0 : index
      %92 = vector.load %arg4[%c2, %c0_39, %c0_40] : memref<4x8x128xf32, #tpu.memory_space<vmem>>, vector<1x8x128xf32>
      %93 = vector.shape_cast %92 : vector<1x8x128xf32> to vector<8x128xf32>
      %94 = arith.addf %93, %78 : vector<8x128xf32>
      %c2_41 = arith.constant 2 : index
      %c0_42 = arith.constant 0 : index
      %c0_43 = arith.constant 0 : index
      %95 = vector.load %arg4[%c2_41, %c0_42, %c0_43] : memref<4x8x128xf32, #tpu.memory_space<vmem>>, vector<1x8x128xf32>
      %96 = vector.shape_cast %95 : vector<1x8x128xf32> to vector<8x128xf32>
      %97 = vector.shape_cast %94 : vector<8x128xf32> to vector<1x8x128xf32>
      tpu.vector_store %arg4[%c2_41, %c0_42, %c0_43], %97 {strides = array<i32>} : memref<4x8x128xf32, #tpu.memory_space<vmem>>, vector<1x8x128xf32>,
      %c3 = arith.constant 3 : index
      %c0_44 = arith.constant 0 : index
      %c0_45 = arith.constant 0 : index
      %98 = vector.load %arg4[%c3, %c0_44, %c0_45] : memref<4x8x128xf32, #tpu.memory_space<vmem>>, vector<1x8x128xf32>
      %99 = vector.shape_cast %98 : vector<1x8x128xf32> to vector<8x128xf32>
      %100 = arith.addf %99, %79 : vector<8x128xf32>
      %c3_46 = arith.constant 3 : index
      %c0_47 = arith.constant 0 : index
      %c0_48 = arith.constant 0 : index
      %101 = vector.load %arg4[%c3_46, %c0_47, %c0_48] : memref<4x8x128xf32, #tpu.memory_space<vmem>>, vector<1x8x128xf32>
      %102 = vector.shape_cast %101 : vector<1x8x128xf32> to vector<8x128xf32>
      %103 = vector.shape_cast %100 : vector<8x128xf32> to vector<1x8x128xf32>
      tpu.vector_store %arg4[%c3_46, %c0_47, %c0_48], %103 {strides = array<i32>} : memref<4x8x128xf32, #tpu.memory_space<vmem>>, vector<1x8x128xf32>,
    } else {
    }
    %c1_i32_3 = arith.constant 1 : i32
    %9 = arith.cmpi sge, %4, %c1_i32_3 : i32
    %10 = arith.extui %9 : i1 to i32
    %c0_i32_4 = arith.constant 0 : i32
    %11 = arith.cmpi ne, %10, %c0_i32_4 : i32
    scf.if %11 {
      %cst = arith.constant 0.000000e+00 : f32
      %12 = vector.broadcast %cst : f32 to vector<8x128xf32>
      %cst_5 = arith.constant 0.000000e+00 : f32
      %13 = vector.broadcast %cst_5 : f32 to vector<8x128xf32>
      %cst_6 = arith.constant 0.000000e+00 : f32
      %14 = vector.broadcast %cst_6 : f32 to vector<8x128xf32>
      %cst_7 = arith.constant 0.000000e+00 : f32
      %15 = vector.broadcast %cst_7 : f32 to vector<8x128xf32>
      %c0_i32_8 = arith.constant 0 : i32
      %c8_i32 = arith.constant 8 : i32
      %16 = arith.muli %c0_i32_8, %c8_i32 : i32
      %17 = tpu.assume_multiple %16, 8 : i32
      %18 = arith.index_cast %17 : i32 to index
      %c0 = arith.constant 0 : index
      %19 = vector.load %arg2[%18, %c0] : memref<16x128xf32, #tpu.memory_space<vmem>>, vector<8x128xf32>
      %20 = arith.index_cast %17 : i32 to index
      %c0_9 = arith.constant 0 : index
      %21 = vector.load %arg3[%20, %c0_9] : memref<16x128xf32, #tpu.memory_space<vmem>>, vector<8x128xf32>
      %22 = math.absf %19 : vector<8x128xf32>
      %cst_10 = arith.constant 0.000000e+00 : f32
      %23 = vector.broadcast %cst_10 : f32 to vector<8x128xf32>
      %24 = arith.subf %23, %22 : vector<8x128xf32>
      %25 = math.exp %24 : vector<8x128xf32>
      %cst_11 = arith.constant 1.000000e+00 : f32
      %26 = vector.broadcast %cst_11 : f32 to vector<8x128xf32>
      %27 = arith.addf %26, %25 : vector<8x128xf32>
      %cst_12 = arith.constant 0.000000e+00 : f32
      %28 = vector.broadcast %cst_12 : f32 to vector<8x128xf32>
      %29 = arith.cmpf oge, %19, %28 : vector<8x128xf32>
      %cst_13 = arith.constant 1.000000e+00 : f32
      %30 = vector.broadcast %cst_13 : f32 to vector<8x128xf32>
      %31 = arith.select %29, %30, %25 : vector<8x128xi1>, vector<8x128xf32>
      %32 = arith.divf %31, %27 : vector<8x128xf32>
      %33 = math.log %27 : vector<8x128xf32>
      %cst_14 = arith.constant -1.000000e+02 : f32
      %cst_15 = arith.constant 1.000000e+02 : f32
      %34 = vector.broadcast %cst_14 : f32 to vector<8x128xf32>
      %35 = arith.maximumf %34, %19 : vector<8x128xf32>
      %36 = vector.broadcast %cst_15 : f32 to vector<8x128xf32>
      %37 = arith.minimumf %36, %35 : vector<8x128xf32>
      %cst_16 = arith.constant 0.000000e+00 : f32
      %38 = vector.broadcast %cst_16 : f32 to vector<8x128xf32>
      %39 = arith.maximumf %37, %38 : vector<8x128xf32>
      %40 = arith.addf %33, %39 : vector<8x128xf32>
      %41 = arith.mulf %37, %21 : vector<8x128xf32>
      %42 = arith.subf %40, %41 : vector<8x128xf32>
      %43 = arith.mulf %32, %21 : vector<8x128xf32>
      %44 = tpu.iota {dimensions = array<i32: 0>} : vector<8x128xi32>
      %45 = tpu.iota {dimensions = array<i32: 1>} : vector<8x128xi32>
      %c128_i32 = arith.constant 128 : i32
      %46 = arith.muli %17, %c128_i32 : i32
      %47 = arith.addi %5, %46 : i32
      %c2048_i32_17 = arith.constant 2048 : i32
      %48 = arith.subi %c2048_i32_17, %47 : i32
      %c128_i32_18 = arith.constant 128 : i32
      %49 = vector.broadcast %c128_i32_18 : i32 to vector<8x128xi32>
      %50 = arith.muli %44, %49 : vector<8x128xi32>
      %51 = arith.addi %50, %45 : vector<8x128xi32>
      %52 = vector.broadcast %48 : i32 to vector<8x128xi32>
      %53 = arith.cmpi slt, %51, %52 : vector<8x128xi32>
      %cst_19 = arith.constant 0.000000e+00 : f32
      %54 = vector.broadcast %cst_19 : f32 to vector<8x128xf32>
      %55 = arith.select %53, %43, %54 : vector<8x128xi1>, vector<8x128xf32>
      %cst_20 = arith.constant 0.000000e+00 : f32
      %56 = vector.broadcast %cst_20 : f32 to vector<8x128xf32>
      %57 = arith.select %53, %32, %56 : vector<8x128xi1>, vector<8x128xf32>
      %cst_21 = arith.constant 0.000000e+00 : f32
      %58 = vector.broadcast %cst_21 : f32 to vector<8x128xf32>
      %59 = arith.select %53, %21, %58 : vector<8x128xi1>, vector<8x128xf32>
      %cst_22 = arith.constant 0.000000e+00 : f32
      %60 = vector.broadcast %cst_22 : f32 to vector<8x128xf32>
      %61 = arith.select %53, %42, %60 : vector<8x128xi1>, vector<8x128xf32>
      %62 = arith.addf %12, %55 : vector<8x128xf32>
      %63 = arith.addf %13, %57 : vector<8x128xf32>
      %64 = arith.addf %14, %59 : vector<8x128xf32>
      %65 = arith.addf %15, %61 : vector<8x128xf32>
      %c1_i32_23 = arith.constant 1 : i32
      %c8_i32_24 = arith.constant 8 : i32
      %66 = arith.muli %c1_i32_23, %c8_i32_24 : i32
      %67 = tpu.assume_multiple %66, 8 : i32
      %68 = arith.index_cast %67 : i32 to index
      %c0_25 = arith.constant 0 : index
      %69 = vector.load %arg2[%68, %c0_25] : memref<16x128xf32, #tpu.memory_space<vmem>>, vector<8x128xf32>
      %70 = arith.index_cast %67 : i32 to index
      %c0_26 = arith.constant 0 : index
      %71 = vector.load %arg3[%70, %c0_26] : memref<16x128xf32, #tpu.memory_space<vmem>>, vector<8x128xf32>
      %72 = math.absf %69 : vector<8x128xf32>
      %cst_27 = arith.constant 0.000000e+00 : f32
      %73 = vector.broadcast %cst_27 : f32 to vector<8x128xf32>
      %74 = arith.subf %73, %72 : vector<8x128xf32>
      %75 = math.exp %74 : vector<8x128xf32>
      %cst_28 = arith.constant 1.000000e+00 : f32
      %76 = vector.broadcast %cst_28 : f32 to vector<8x128xf32>
      %77 = arith.addf %76, %75 : vector<8x128xf32>
      %cst_29 = arith.constant 0.000000e+00 : f32
      %78 = vector.broadcast %cst_29 : f32 to vector<8x128xf32>
      %79 = arith.cmpf oge, %69, %78 : vector<8x128xf32>
      %cst_30 = arith.constant 1.000000e+00 : f32
      %80 = vector.broadcast %cst_30 : f32 to vector<8x128xf32>
      %81 = arith.select %79, %80, %75 : vector<8x128xi1>, vector<8x128xf32>
      %82 = arith.divf %81, %77 : vector<8x128xf32>
      %83 = math.log %77 : vector<8x128xf32>
      %cst_31 = arith.constant -1.000000e+02 : f32
      %cst_32 = arith.constant 1.000000e+02 : f32
      %84 = vector.broadcast %cst_31 : f32 to vector<8x128xf32>
      %85 = arith.maximumf %84, %69 : vector<8x128xf32>
      %86 = vector.broadcast %cst_32 : f32 to vector<8x128xf32>
      %87 = arith.minimumf %86, %85 : vector<8x128xf32>
      %cst_33 = arith.constant 0.000000e+00 : f32
      %88 = vector.broadcast %cst_33 : f32 to vector<8x128xf32>
      %89 = arith.maximumf %87, %88 : vector<8x128xf32>
      %90 = arith.addf %83, %89 : vector<8x128xf32>
      %91 = arith.mulf %87, %71 : vector<8x128xf32>
      %92 = arith.subf %90, %91 : vector<8x128xf32>
      %93 = arith.mulf %82, %71 : vector<8x128xf32>
      %94 = tpu.iota {dimensions = array<i32: 0>} : vector<8x128xi32>
      %95 = tpu.iota {dimensions = array<i32: 1>} : vector<8x128xi32>
      %c128_i32_34 = arith.constant 128 : i32
      %96 = arith.muli %67, %c128_i32_34 : i32
      %97 = arith.addi %5, %96 : i32
      %c2048_i32_35 = arith.constant 2048 : i32
      %98 = arith.subi %c2048_i32_35, %97 : i32
      %c128_i32_36 = arith.constant 128 : i32
      %99 = vector.broadcast %c128_i32_36 : i32 to vector<8x128xi32>
      %100 = arith.muli %94, %99 : vector<8x128xi32>
      %101 = arith.addi %100, %95 : vector<8x128xi32>
      %102 = vector.broadcast %98 : i32 to vector<8x128xi32>
      %103 = arith.cmpi slt, %101, %102 : vector<8x128xi32>
      %cst_37 = arith.constant 0.000000e+00 : f32
      %104 = vector.broadcast %cst_37 : f32 to vector<8x128xf32>
      %105 = arith.select %103, %93, %104 : vector<8x128xi1>, vector<8x128xf32>
      %cst_38 = arith.constant 0.000000e+00 : f32
      %106 = vector.broadcast %cst_38 : f32 to vector<8x128xf32>
      %107 = arith.select %103, %82, %106 : vector<8x128xi1>, vector<8x128xf32>
      %cst_39 = arith.constant 0.000000e+00 : f32
      %108 = vector.broadcast %cst_39 : f32 to vector<8x128xf32>
      %109 = arith.select %103, %71, %108 : vector<8x128xi1>, vector<8x128xf32>
      %cst_40 = arith.constant 0.000000e+00 : f32
      %110 = vector.broadcast %cst_40 : f32 to vector<8x128xf32>
      %111 = arith.select %103, %92, %110 : vector<8x128xi1>, vector<8x128xf32>
      %112 = arith.addf %62, %105 : vector<8x128xf32>
      %113 = arith.addf %63, %107 : vector<8x128xf32>
      %114 = arith.addf %64, %109 : vector<8x128xf32>
      %115 = arith.addf %65, %111 : vector<8x128xf32>
      %c2_i32 = arith.constant 2 : i32
      %c0_41 = arith.constant 0 : index
      %c0_42 = arith.constant 0 : index
      %c0_43 = arith.constant 0 : index
      %116 = vector.load %arg4[%c0_41, %c0_42, %c0_43] : memref<4x8x128xf32, #tpu.memory_space<vmem>>, vector<1x8x128xf32>
      %117 = vector.shape_cast %116 : vector<1x8x128xf32> to vector<8x128xf32>
      %118 = arith.addf %117, %112 : vector<8x128xf32>
      %c0_44 = arith.constant 0 : index
      %c0_45 = arith.constant 0 : index
      %c0_46 = arith.constant 0 : index
      %119 = vector.load %arg4[%c0_44, %c0_45, %c0_46] : memref<4x8x128xf32, #tpu.memory_space<vmem>>, vector<1x8x128xf32>
      %120 = vector.shape_cast %119 : vector<1x8x128xf32> to vector<8x128xf32>
      %121 = vector.shape_cast %118 : vector<8x128xf32> to vector<1x8x128xf32>
      tpu.vector_store %arg4[%c0_44, %c0_45, %c0_46], %121 {strides = array<i32>} : memref<4x8x128xf32, #tpu.memory_space<vmem>>, vector<1x8x128xf32>,
      %c1 = arith.constant 1 : index
      %c0_47 = arith.constant 0 : index
      %c0_48 = arith.constant 0 : index
      %122 = vector.load %arg4[%c1, %c0_47, %c0_48] : memref<4x8x128xf32, #tpu.memory_space<vmem>>, vector<1x8x128xf32>
      %123 = vector.shape_cast %122 : vector<1x8x128xf32> to vector<8x128xf32>
      %124 = arith.addf %123, %113 : vector<8x128xf32>
      %c1_49 = arith.constant 1 : index
      %c0_50 = arith.constant 0 : index
      %c0_51 = arith.constant 0 : index
      %125 = vector.load %arg4[%c1_49, %c0_50, %c0_51] : memref<4x8x128xf32, #tpu.memory_space<vmem>>, vector<1x8x128xf32>
      %126 = vector.shape_cast %125 : vector<1x8x128xf32> to vector<8x128xf32>
      %127 = vector.shape_cast %124 : vector<8x128xf32> to vector<1x8x128xf32>
      tpu.vector_store %arg4[%c1_49, %c0_50, %c0_51], %127 {strides = array<i32>} : memref<4x8x128xf32, #tpu.memory_space<vmem>>, vector<1x8x128xf32>,
      %c2 = arith.constant 2 : index
      %c0_52 = arith.constant 0 : index
      %c0_53 = arith.constant 0 : index
      %128 = vector.load %arg4[%c2, %c0_52, %c0_53] : memref<4x8x128xf32, #tpu.memory_space<vmem>>, vector<1x8x128xf32>
      %129 = vector.shape_cast %128 : vector<1x8x128xf32> to vector<8x128xf32>
      %130 = arith.addf %129, %114 : vector<8x128xf32>
      %c2_54 = arith.constant 2 : index
      %c0_55 = arith.constant 0 : index
      %c0_56 = arith.constant 0 : index
      %131 = vector.load %arg4[%c2_54, %c0_55, %c0_56] : memref<4x8x128xf32, #tpu.memory_space<vmem>>, vector<1x8x128xf32>
      %132 = vector.shape_cast %131 : vector<1x8x128xf32> to vector<8x128xf32>
      %133 = vector.shape_cast %130 : vector<8x128xf32> to vector<1x8x128xf32>
      tpu.vector_store %arg4[%c2_54, %c0_55, %c0_56], %133 {strides = array<i32>} : memref<4x8x128xf32, #tpu.memory_space<vmem>>, vector<1x8x128xf32>,
      %c3 = arith.constant 3 : index
      %c0_57 = arith.constant 0 : index
      %c0_58 = arith.constant 0 : index
      %134 = vector.load %arg4[%c3, %c0_57, %c0_58] : memref<4x8x128xf32, #tpu.memory_space<vmem>>, vector<1x8x128xf32>
      %135 = vector.shape_cast %134 : vector<1x8x128xf32> to vector<8x128xf32>
      %136 = arith.addf %135, %115 : vector<8x128xf32>
      %c3_59 = arith.constant 3 : index
      %c0_60 = arith.constant 0 : index
      %c0_61 = arith.constant 0 : index
      %137 = vector.load %arg4[%c3_59, %c0_60, %c0_61] : memref<4x8x128xf32, #tpu.memory_space<vmem>>, vector<1x8x128xf32>
      %138 = vector.shape_cast %137 : vector<1x8x128xf32> to vector<8x128xf32>
      %139 = vector.shape_cast %136 : vector<8x128xf32> to vector<1x8x128xf32>
      tpu.vector_store %arg4[%c3_59, %c0_60, %c0_61], %139 {strides = array<i32>} : memref<4x8x128xf32, #tpu.memory_space<vmem>>, vector<1x8x128xf32>,
    } else {
    }
    return
  }
  func.func @transform_0(%arg0: i32, %arg1: i32) -> (i32, i32) {
    %c1_i32 = arith.constant 1 : i32
    %0 = arith.muli %arg0, %c1_i32 : i32
    %1 = arith.addi %0, %arg1 : i32
    %c0_i32 = arith.constant 0 : i32
    %2 = arith.minsi %1, %c0_i32 : i32
    %c0_i32_0 = arith.constant 0 : i32
    %c0_i32_1 = arith.constant 0 : i32
    return %2, %c0_i32_0 : i32, i32
  }
  func.func @transform_1(%arg0: i32, %arg1: i32) -> (i32, i32) {
    %c1_i32 = arith.constant 1 : i32
    %0 = arith.muli %arg0, %c1_i32 : i32
    %1 = arith.addi %0, %arg1 : i32
    %c0_i32 = arith.constant 0 : i32
    %2 = arith.minsi %1, %c0_i32 : i32
    %c0_i32_0 = arith.constant 0 : i32
    %c0_i32_1 = arith.constant 0 : i32
    return %2, %c0_i32_0 : i32, i32
  }
  func.func @transform_2(%arg0: i32, %arg1: i32) -> (i32, i32, i32) {
    %c0_i32 = arith.constant 0 : i32
    %c0_i32_0 = arith.constant 0 : i32
    %c0_i32_1 = arith.constant 0 : i32
    return %arg0, %c0_i32, %c0_i32_0 : i32, i32, i32
  }
}

</mosaic_0001>

<llo_original>
// kernel: tpu_custom_call.1
$region0: #{tpu_custom_call.1}
  #allocation0 [shape = 'u32[]', space=smem, size = 0x4, offset = 0x4, fixed_abs, tag = 'smem constant byte address 0x4 - core index']
  #allocation1 [shape = 'u32[72,128]{1,0:T(1,128)}', space=vmem, size = 0x9000, scoped, tag = 'internal scratch']
  %s0 = inlined_call_operand.hbm [shape: f32[16,128], index: 0, kind: input, shape index: {}]
  %s1 = inlined_call_operand.hbm [shape: f32[16,128], index: 1, kind: input, shape index: {}]
  %s2 = inlined_call_operand.hbm [shape: f32[4,8,128], index: 2, kind: output, shape index: {}]
  %s3 = sld [smem:[#allocation0]]
  $region38: #{tpu_custom_call.1} parent=0
    _
  %s5 = ssub.s32 1, %s3
  %s6 = scalar_select 0, %s5, %s3
  $region1: #{tpu_custom_call.1} parent=0
    #allocation2 [shape = 'u8[8192]{0}', space=vmem, size = 0x2000, scoped, tag = 'input window, operand 0, single buffered']
    #allocation3 [shape = 's32[1]{0}', space=sflag, size = 0x4, scoped, tag = 'scoped memory for tpu_custom_call.1']
    #allocation4 [shape = 's32[1]{0}', space=sflag, size = 0x4, scoped, tag = 'scoped memory for tpu_custom_call.1']
    #allocation5 [shape = 'u8[8192]{0}', space=vmem, size = 0x2000, scoped, tag = 'input window, operand 1, single buffered']
    #allocation6 [shape = 's32[1]{0}', space=sflag, size = 0x4, scoped, tag = 'scoped memory for tpu_custom_call.1']
    #allocation7 [shape = 'u8[16384]{0}', space=vmem, size = 0x4000, scoped, tag = 'output window, operand 0, single buffered']
    %7 = vsyncpa [#allocation3], 0
    %8 = vsyncpa [#allocation6], 0
    %9 = vsyncpa [#allocation4], 0
    // Predicated region
    $region2: #{tpu_custom_call.1} parent=1 // pred_check
      _
    $region3: #{tpu_custom_call.1} parent=1 // pred_check_branch
      %11 = sbr.rel (0) target = $region5
    $region4: #{tpu_custom_call.1} parent=1 // pred_region
      %s12 = sadd.s32 0, 0
      %p13 = scmp.lt.s32.totalorder %s12, 0
      %s14 = scalar_select %p13, %s12, 0
      %s15 = smul.u32 2, %s14
      %17 = vsyncadd [#allocation3], 0
      %s18 = smul.addr %s15, 8
      %s19 = scalar_lea.hbm %s0, %s18
      %s20 = sshll.u32 %s19, 4
      %s21 = int_to_ptr.hbm [resolvable:$true] %s20
      %s22 = sshll.u32 [#allocation2], 4
      %s23 = int_to_ptr.vmem [resolvable:$true] %s22
      %28 = dma.hbm_to_vmem [thread:$0]  %s21, 256, %s23, [#allocation3], 128, 128, 8
    $region5: #{tpu_custom_call.1} parent=1 // pred_fallthru
      _
    // Predicated region
    $region6: #{tpu_custom_call.1} parent=1 // pred_check
      _
    $region7: #{tpu_custom_call.1} parent=1 // pred_check_branch
      %30 = sbr.rel (0) target = $region9
    $region8: #{tpu_custom_call.1} parent=1 // pred_region
      %s31 = sadd.s32 0, 0
      %p32 = scmp.lt.s32.totalorder %s31, 0
      %s33 = scalar_select %p32, %s31, 0
      %s34 = smul.u32 2, %s33
      %36 = vsyncadd [#allocation6], 0
      %s37 = smul.addr %s34, 8
      %s38 = scalar_lea.hbm %s1, %s37
      %s39 = sshll.u32 %s38, 4
      %s40 = int_to_ptr.hbm [resolvable:$true] %s39
      %s41 = sshll.u32 [#allocation5], 4
      %s42 = int_to_ptr.vmem [resolvable:$true] %s41
      %47 = dma.hbm_to_vmem [thread:$0]  %s40, 256, %s42, [#allocation6], 128, 128, 8
    $region9: #{tpu_custom_call.1} parent=1 // pred_fallthru
      _
    // Predicated region
    $region10: #{tpu_custom_call.1} parent=1 // pred_check
      _
    $region11: #{tpu_custom_call.1} parent=1 // pred_check_branch
      %49 = sbr.rel (0) target = $region13
    $region12: #{tpu_custom_call.1} parent=1 // pred_region
      %51 = dma.done [#allocation3], 256
    $region13: #{tpu_custom_call.1} parent=1 // pred_fallthru
      _
    // Predicated region
    $region14: #{tpu_custom_call.1} parent=1 // pred_check
      _
    $region15: #{tpu_custom_call.1} parent=1 // pred_check_branch
      %53 = sbr.rel (0) target = $region17
    $region16: #{tpu_custom_call.1} parent=1 // pred_region
      %55 = dma.done [#allocation6], 256
    $region17: #{tpu_custom_call.1} parent=1 // pred_fallthru
      _
    %s56 = sadd.s32 0, 0
    %p57 = scmp.lt.s32.totalorder %s56, 0
    %s58 = scalar_select %p57, %s56, 0
    %s59 = smul.u32 2, %s58
    %s60 = sadd.s32 0, 0
    %p61 = scmp.lt.s32.totalorder %s60, 0
    %s62 = scalar_select %p61, %s60, 0
    %s63 = smul.u32 2, %s62
    %p64 = scmp.eq.s32.totalorder 0, 0
    // Predicated region
    $region18: #{tpu_custom_call.1} parent=1 // pred_check
      %p65 = pneg %p64
    $region19: #{tpu_custom_call.1} parent=1 // pred_check_branch
      %67 = sbr.rel (%p65) target = $region21
    $region20: #{tpu_custom_call.1} parent=1 // pred_region
      %68 = vst [vmem:[#allocation7] sm:$0xff] 0.0
      %69 = vst [vmem:[#allocation7 + $0x8] sm:$0xff] 0.0
      %70 = vst [vmem:[#allocation7 + $0x10] sm:$0xff] 0.0
      %71 = vst [vmem:[#allocation7 + $0x18] sm:$0xff] 0.0
    $region21: #{tpu_custom_call.1} parent=1 // pred_fallthru
      _
    %s72 = sadd.s32 0, 0
    %s73 = smul.u32 %s72, 2048
    %p74 = scmp.lt.s32.totalorder %s72, 1
    // Predicated region
    $region22: #{tpu_custom_call.1} parent=1 // pred_check
      %p75 = pneg %p74
    $region23: #{tpu_custom_call.1} parent=1 // pred_check_branch
      %77 = sbr.rel (%p75) target = $region25
    $region24: #{tpu_custom_call.1} parent=1 // pred_region
      %v78 = vld [vmem:[#allocation2] sm:$0xff]
      %v79 = vld [vmem:[#allocation5] sm:$0xff]
      %v80 = vand.u32 2147483647, %v78
      %v81 = vsub.f32 0.0, %v80
      %v82 = vmul.f32 %v81, 1.442695
      %v83 = vpow.pop %v82
      %v84 = vadd.f32 %v83, 1.0
      %vm85 = vcmp.ge.f32.partialorder %v78, 0.0
      %v86 = vsel %vm85, 1.0, %v83
      %v87 = vrcp.pop %v84
      %v88 = vmul.f32 %v84, %v87
      %v89 = vsub.f32 1.0, %v88
      %v90 = vmul.f32 %v87, %v89
      %v91 = vadd.f32 %v87, %v90
      %vm92 = vweird.f32 %v84
      %vm93 = vweird.f32 %v87
      %vm94 = vmor %vm92, %vm93
      %v95 = vsel %vm94, %v87, %v91
      %v96 = vand.u32 2147483647, %v84
      %vm97 = vcmp.eq.f32.partialorder %v96, 8.507059e+37
      %v98 = vand.u32 %v84, 2147483648
      %v99 = vor.u32 1.1754944e-38, %v98
      %v100 = vsel %vm97, %v99, %v95
      %v101 = vmul.f32 %v86, %v100
      %v102 = vlog2.pop %v84
      %v103 = vmul.f32 %v102, 0.6931472
      %v104 = vmax.f32 %v78, -100.0
      %v105 = vmin.f32 %v104, 100.0
      %v106 = vmax.f32 %v105, 0.0
      %v107 = vadd.f32 %v103, %v106
      %v108 = vmul.f32 %v105, %v79
      %v109 = vsub.f32 %v107, %v108
      %v110 = vmul.f32 %v101, %v79
      %v111 = vadd.f32 %v110, 0.0
      %v112 = vadd.f32 %v101, 0.0
      %v113 = vadd.f32 %v79, 0.0
      %v114 = vadd.f32 %v109, 0.0
      %s115 = scalar_lea.vmem [#allocation2], 8
      %v116 = vld [vmem:[%s115] sm:$0xff]
      %s117 = scalar_lea.vmem [#allocation5], 8
      %v118 = vld [vmem:[%s117] sm:$0xff]
      %v119 = vand.u32 2147483647, %v116
      %v120 = vsub.f32 0.0, %v119
      %v121 = vmul.f32 %v120, 1.442695
      %v122 = vpow.pop %v121
      %v123 = vadd.f32 %v122, 1.0
      %vm124 = vcmp.ge.f32.partialorder %v116, 0.0
      %v125 = vsel %vm124, 1.0, %v122
      %v126 = vrcp.pop %v123
      %v127 = vmul.f32 %v123, %v126
      %v128 = vsub.f32 1.0, %v127
      %v129 = vmul.f32 %v126, %v128
      %v130 = vadd.f32 %v126, %v129
      %vm131 = vweird.f32 %v123
      %vm132 = vweird.f32 %v126
      %vm133 = vmor %vm131, %vm132
      %v134 = vsel %vm133, %v126, %v130
      %v135 = vand.u32 2147483647, %v123
      %vm136 = vcmp.eq.f32.partialorder %v135, 8.507059e+37
      %v137 = vand.u32 %v123, 2147483648
      %v138 = vor.u32 1.1754944e-38, %v137
      %v139 = vsel %vm136, %v138, %v134
      %v140 = vmul.f32 %v125, %v139
      %v141 = vlog2.pop %v123
      %v142 = vmul.f32 %v141, 0.6931472
      %v143 = vmax.f32 %v116, -100.0
      %v144 = vmin.f32 %v143, 100.0
      %v145 = vmax.f32 %v144, 0.0
      %v146 = vadd.f32 %v142, %v145
      %v147 = vmul.f32 %v144, %v118
      %v148 = vsub.f32 %v146, %v147
      %v149 = vmul.f32 %v140, %v118
      %v150 = vadd.f32 %v111, %v149
      %v151 = vadd.f32 %v112, %v140
      %v152 = vadd.f32 %v113, %v118
      %v153 = vadd.f32 %v114, %v148
      %v154 = vld [vmem:[#allocation7] sm:$0xff]
      %v155 = vadd.f32 %v154, %v150
      %156 = vst [vmem:[#allocation7] sm:$0xff] %v155
      %s157 = scalar_lea.vmem [#allocation7], 8
      %v158 = vld [vmem:[%s157] sm:$0xff]
      %v159 = vadd.f32 %v158, %v151
      %160 = vst [vmem:[%s157] sm:$0xff] %v159
      %s161 = scalar_lea.vmem [#allocation7], 16
      %v162 = vld [vmem:[%s161] sm:$0xff]
      %v163 = vadd.f32 %v162, %v152
      %164 = vst [vmem:[%s161] sm:$0xff] %v163
      %s165 = scalar_lea.vmem [#allocation7], 24
      %v166 = vld [vmem:[%s165] sm:$0xff]
      %v167 = vadd.f32 %v166, %v153
      %168 = vst [vmem:[%s165] sm:$0xff] %v167
    $region25: #{tpu_custom_call.1} parent=1 // pred_fallthru
      _
    %p169 = scmp.ge.s32.totalorder %s72, 1
    // Predicated region
    $region26: #{tpu_custom_call.1} parent=1 // pred_check
      %p170 = pneg %p169
    $region27: #{tpu_custom_call.1} parent=1 // pred_check_branch
      %172 = sbr.rel (%p170) target = $region29
    $region28: #{tpu_custom_call.1} parent=1 // pred_region
      %v173 = vld [vmem:[#allocation2] sm:$0xff]
      %v174 = vld [vmem:[#allocation5] sm:$0xff]
      %v175 = vand.u32 2147483647, %v173
      %v176 = vsub.f32 0.0, %v175
      %v177 = vmul.f32 %v176, 1.442695
      %v178 = vpow.pop %v177
      %v179 = vadd.f32 %v178, 1.0
      %vm180 = vcmp.ge.f32.partialorder %v173, 0.0
      %v181 = vsel %vm180, 1.0, %v178
      %v182 = vrcp.pop %v179
      %v183 = vmul.f32 %v179, %v182
      %v184 = vsub.f32 1.0, %v183
      %v185 = vmul.f32 %v182, %v184
      %v186 = vadd.f32 %v182, %v185
      %vm187 = vweird.f32 %v179
      %vm188 = vweird.f32 %v182
      %vm189 = vmor %vm187, %vm188
      %v190 = vsel %vm189, %v182, %v186
      %v191 = vand.u32 2147483647, %v179
      %vm192 = vcmp.eq.f32.partialorder %v191, 8.507059e+37
      %v193 = vand.u32 %v179, 2147483648
      %v194 = vor.u32 1.1754944e-38, %v193
      %v195 = vsel %vm192, %v194, %v190
      %v196 = vmul.f32 %v181, %v195
      %v197 = vlog2.pop %v179
      %v198 = vmul.f32 %v197, 0.6931472
      %v199 = vmax.f32 %v173, -100.0
      %v200 = vmin.f32 %v199, 100.0
      %v201 = vmax.f32 %v200, 0.0
      %v202 = vadd.f32 %v198, %v201
      %v203 = vmul.f32 %v200, %v174
      %v204 = vsub.f32 %v202, %v203
      %v205 = vmul.f32 %v196, %v174
      %v206 = vlaneseq
      %v207 = vshrl.u32 %v206, 7
      %v208 = vlaneseq
      %v209 = vand.u32 %v208, 127
      %s210 = smul.u32 0, 128
      %s211 = sadd.s32 %s73, %s210
      %s212 = ssub.s32 2048, %s211
      %v213 = vmul.u32 %v207, 128
      %v214 = vadd.s32 %v213, %v209
      %v215 = vstv %s212
      %vm216 = vcmp.lt.s32.totalorder %v214, %v215
      %v217 = vsel %vm216, %v205, 0.0
      %v218 = vsel %vm216, %v196, 0.0
      %v219 = vsel %vm216, %v174, 0.0
      %v220 = vsel %vm216, %v204, 0.0
      %v221 = vadd.f32 %v217, 0.0
      %v222 = vadd.f32 %v218, 0.0
      %v223 = vadd.f32 %v219, 0.0
      %v224 = vadd.f32 %v220, 0.0
      %s225 = scalar_lea.vmem [#allocation2], 8
      %v226 = vld [vmem:[%s225] sm:$0xff]
      %s227 = scalar_lea.vmem [#allocation5], 8
      %v228 = vld [vmem:[%s227] sm:$0xff]
      %v229 = vand.u32 2147483647, %v226
      %v230 = vsub.f32 0.0, %v229
      %v231 = vmul.f32 %v230, 1.442695
      %v232 = vpow.pop %v231
      %v233 = vadd.f32 %v232, 1.0
      %vm234 = vcmp.ge.f32.partialorder %v226, 0.0
      %v235 = vsel %vm234, 1.0, %v232
      %v236 = vrcp.pop %v233
      %v237 = vmul.f32 %v233, %v236
      %v238 = vsub.f32 1.0, %v237
      %v239 = vmul.f32 %v236, %v238
      %v240 = vadd.f32 %v236, %v239
      %vm241 = vweird.f32 %v233
      %vm242 = vweird.f32 %v236
      %vm243 = vmor %vm241, %vm242
      %v244 = vsel %vm243, %v236, %v240
      %v245 = vand.u32 2147483647, %v233
      %vm246 = vcmp.eq.f32.partialorder %v245, 8.507059e+37
      %v247 = vand.u32 %v233, 2147483648
      %v248 = vor.u32 1.1754944e-38, %v247
      %v249 = vsel %vm246, %v248, %v244
      %v250 = vmul.f32 %v235, %v249
      %v251 = vlog2.pop %v233
      %v252 = vmul.f32 %v251, 0.6931472
      %v253 = vmax.f32 %v226, -100.0
      %v254 = vmin.f32 %v253, 100.0
      %v255 = vmax.f32 %v254, 0.0
      %v256 = vadd.f32 %v252, %v255
      %v257 = vmul.f32 %v254, %v228
      %v258 = vsub.f32 %v256, %v257
      %v259 = vmul.f32 %v250, %v228
      %s260 = smul.u32 8, 128
      %s261 = sadd.s32 %s73, %s260
      %s262 = ssub.s32 2048, %s261
      %v263 = vstv %s262
      %vm264 = vcmp.lt.s32.totalorder %v214, %v263
      %v265 = vsel %vm264, %v259, 0.0
      %v266 = vsel %vm264, %v250, 0.0
      %v267 = vsel %vm264, %v228, 0.0
      %v268 = vsel %vm264, %v258, 0.0
      %v269 = vadd.f32 %v221, %v265
      %v270 = vadd.f32 %v222, %v266
      %v271 = vadd.f32 %v223, %v267
      %v272 = vadd.f32 %v224, %v268
      %v273 = vld [vmem:[#allocation7] sm:$0xff]
      %v274 = vadd.f32 %v273, %v269
      %275 = vst [vmem:[#allocation7] sm:$0xff] %v274
      %s276 = scalar_lea.vmem [#allocation7], 8
      %v277 = vld [vmem:[%s276] sm:$0xff]
      %v278 = vadd.f32 %v277, %v270
      %279 = vst [vmem:[%s276] sm:$0xff] %v278
      %s280 = scalar_lea.vmem [#allocation7], 16
      %v281 = vld [vmem:[%s280] sm:$0xff]
      %v282 = vadd.f32 %v281, %v271
      %283 = vst [vmem:[%s280] sm:$0xff] %v282
      %s284 = scalar_lea.vmem [#allocation7], 24
      %v285 = vld [vmem:[%s284] sm:$0xff]
      %v286 = vadd.f32 %v285, %v272
      %287 = vst [vmem:[%s284] sm:$0xff] %v286
    $region29: #{tpu_custom_call.1} parent=1 // pred_fallthru
      _
    // Predicated region
    $region30: #{tpu_custom_call.1} parent=1 // pred_check
      _
    $region31: #{tpu_custom_call.1} parent=1 // pred_check_branch
      %289 = sbr.rel (0) target = $region33
    $region32: #{tpu_custom_call.1} parent=1 // pred_region
      %291 = vsyncadd [#allocation4], 0
      %s292 = sshll.u32 [#allocation7], 4
      %s293 = int_to_ptr.vmem [resolvable:$true] %s292
      %s294 = sshll.u32 %s2, 4
      %s295 = int_to_ptr.hbm [resolvable:$true] %s294
      %300 = dma.vmem_to_hbm [thread:$0]  %s293, 512, %s295, [#allocation4], 128, 128, 8
    $region33: #{tpu_custom_call.1} parent=1 // pred_fallthru
      _
    // Predicated region
    $region34: #{tpu_custom_call.1} parent=1 // pred_check
      _
    $region35: #{tpu_custom_call.1} parent=1 // pred_check_branch
      %302 = sbr.rel (0) target = $region37
    $region36: #{tpu_custom_call.1} parent=1 // pred_region
      %304 = dma.done [#allocation4], 512
    $region37: #{tpu_custom_call.1} parent=1 // pred_fallthru
      _
    %305 = vsyncpa [#allocation3], 1
    %306 = vsyncpa [#allocation6], 1
    %307 = vsyncpa [#allocation4], 1

</llo_original>
